<compile_context>
chip_gen: v5e
topology: v5e:2x2
jax: 0.10.0
libtpu: 0.0.40
codegen_flags: <defaults>
</compile_context>

<pallas_src>
import functools

import jax
import jax.numpy as jnp
from jax.experimental import pallas as pl
from jax.experimental.pallas import tpu as pltpu

BN_EPS = 1e-5


def _bn_prelu(h, gamma, beta, a, inv_n):
    """Training-mode BatchNorm1d (batch stats, biased var) + PReLU.

    Single-pass stats; gamma and mean are folded into a per-feature affine
    (scale s, offset b) so the full-tile work is one mul for h*h, two XLU
    reductions, and one mul+add for the normalization.  `a` is a scalar PReLU
    slope read from SMEM; `inv_n` is a static Python float (1/batch).
    """
    sum_h = jnp.sum(h, axis=0, keepdims=True)
    sum_h2 = jnp.sum(h * h, axis=0, keepdims=True)
    mean = sum_h * inv_n
    var = sum_h2 * inv_n - mean * mean
    s = gamma * jax.lax.rsqrt(var + BN_EPS)     # fused affine scale (EUP rsqrt)
    b = beta - mean * s                         # per-feature row math (cheap)
    hn = h * s + b
    return jnp.where(hn > 0, hn, a * hn)


def dqn_kernel(x_ref, w1_ref, w2_ref, w3_ref, bn_ref, b3_ref, a_ref, o_ref):
    x = x_ref[...]
    inv_n = 1.0 / x.shape[0]   # static at trace time
    a1 = a_ref[0]              # scalar PReLU slopes from SMEM
    a2 = a_ref[1]

    # ---- layer 1: Linear -> BatchNorm1d -> PReLU ----
    # (Linear bias omitted: exactly cancelled by the BN mean subtraction.)
    h = jnp.dot(x, w1_ref[...], preferred_element_type=jnp.float32)
    h = _bn_prelu(h, bn_ref[0:1, :], bn_ref[1:2, :], a1, inv_n)

    # ---- layer 2: Linear -> BatchNorm1d -> PReLU ----
    h = jnp.dot(h, w2_ref[...], preferred_element_type=jnp.float32)
    h = _bn_prelu(h, bn_ref[2:3, :], bn_ref[3:4, :], a2, inv_n)

    # ---- final Linear (bias kept: no BN after it) ----
    o_ref[...] = (jnp.dot(h, w3_ref[...], preferred_element_type=jnp.float32)
                  + b3_ref[...]).astype(o_ref.dtype)


@functools.partial(jax.jit, static_argnames=())
def dqn_forward(x, params):
    n, _ = x.shape
    output_dim = params["w3"].shape[1]

    # Pack per-feature BN parameter rows into one VMEM slab (one DMA instead of 4),
    # and the two PReLU slopes into one SMEM scalar array.
    bn_slab = jnp.concatenate(
        [params["g1"], params["be1"], params["g2"], params["be2"]], axis=0)  # (4, H)
    a_scalars = jnp.stack(
        [params["a1"].reshape(()), params["a2"].reshape(())]).astype(jnp.float32)  # (2,)

    vmem = pl.BlockSpec(memory_space=pltpu.MemorySpace.VMEM)
    smem = pl.BlockSpec(memory_space=pltpu.MemorySpace.SMEM)

    args = (x, params["w1"], params["w2"], params["w3"], bn_slab, params["b3"],
            a_scalars)
    in_specs = [vmem, vmem, vmem, vmem, vmem, vmem, smem]

    return pl.pallas_call(
        dqn_kernel,
        out_shape=jax.ShapeDtypeStruct((n, output_dim), jnp.float32),
        in_specs=in_specs,
        out_specs=vmem,
    )(*args)


def init_params(key, input_dim, output_dim, hidden_dim):
    """Deterministic, PyTorch-flavored init (uniform +/- 1/sqrt(fan_in))."""
    ks = jax.random.split(key, 6)

    def lin(k, fan_in, fan_out):
        bound = 1.0 / jnp.sqrt(jnp.float32(fan_in))
        kw, kb = jax.random.split(k)
        w = jax.random.uniform(kw, (fan_in, fan_out), jnp.float32, -bound, bound)
        b = jax.random.uniform(kb, (1, fan_out), jnp.float32, -bound, bound)
        return w, b

    w1, b1 = lin(ks[0], input_dim, hidden_dim)
    w2, b2 = lin(ks[1], hidden_dim, hidden_dim)
    w3, b3 = lin(ks[2], hidden_dim, output_dim)

    return {
        "w1": w1, "b1": b1,
        "g1": jnp.ones((1, hidden_dim), jnp.float32),
        "be1": jnp.zeros((1, hidden_dim), jnp.float32),
        "a1": jnp.full((1, 1), 0.25, jnp.float32),
        "w2": w2, "b2": b2,
        "g2": jnp.ones((1, hidden_dim), jnp.float32),
        "be2": jnp.zeros((1, hidden_dim), jnp.float32),
        "a2": jnp.full((1, 1), 0.25, jnp.float32),
        "w3": w3, "b3": b3,
    }


def dqn_reference(x, p):
    """Pure-JAX reference with the FULL PyTorch semantics (incl. b1/b2)."""
    def bn_prelu(h, g, be, a):
        m = jnp.mean(h, axis=0, keepdims=True)
        v = jnp.mean((h - m) ** 2, axis=0, keepdims=True)
        hn = (h - m) / jnp.sqrt(v + BN_EPS) * g + be
        return jnp.where(hn > 0, hn, a * hn)

    h = bn_prelu(x @ p["w1"] + p["b1"], p["g1"], p["be1"], p["a1"][0, 0])
    h = bn_prelu(h @ p["w2"] + p["b2"], p["g2"], p["be2"], p["a2"][0, 0])
    return h @ p["w3"] + p["b3"]


if __name__ == "__main__":
    input_dim, output_dim, hidden_dim = 16, 4, 32
    batch = 8

    key = jax.random.PRNGKey(0)
    kx, kp = jax.random.split(key)
    x = jax.random.normal(kx, (batch, input_dim), jnp.float32)
    params = init_params(kp, input_dim, output_dim, hidden_dim)

    out = dqn_forward(x, params)
    out = jax.block_until_ready(out)

    ref = dqn_reference(x, params)
    assert out.shape == (batch, output_dim)
    assert jnp.allclose(out, ref, atol=1e-4, rtol=1e-4), "mismatch vs reference"

    print("KERNEL_OK")
</pallas_src>

<mosaic_0001>
module attributes {stable_mosaic.version = 11 : i64} {
  func.func @dqn_kernel(%arg0: memref<8x16xf32, #tpu.memory_space<vmem>>, %arg1: memref<16x32xf32, #tpu.memory_space<vmem>>, %arg2: memref<32x32xf32, #tpu.memory_space<vmem>>, %arg3: memref<32x4xf32, #tpu.memory_space<vmem>>, %arg4: memref<4x32xf32, #tpu.memory_space<vmem>>, %arg5: memref<1x4xf32, #tpu.memory_space<vmem>>, %arg6: memref<2xf32, #tpu.memory_space<smem>>, %arg7: memref<8x4xf32, #tpu.memory_space<vmem>>) attributes {dimension_semantics = [], scalar_prefetch = 0 : i64, scratch_operands = 0 : i64, tpu.core_type = #tpu.core_type<tc>} {
    %c0 = arith.constant 0 : index
    %c0_0 = arith.constant 0 : index
    %0 = vector.load %arg0[%c0, %c0_0] : memref<8x16xf32, #tpu.memory_space<vmem>>, vector<8x16xf32>
    %c0_1 = arith.constant 0 : index
    %1 = memref.load %arg6[%c0_1] : memref<2xf32, #tpu.memory_space<smem>>
    %c1 = arith.constant 1 : index
    %2 = memref.load %arg6[%c1] : memref<2xf32, #tpu.memory_space<smem>>
    %c0_2 = arith.constant 0 : index
    %c0_3 = arith.constant 0 : index
    %3 = vector.load %arg1[%c0_2, %c0_3] : memref<16x32xf32, #tpu.memory_space<vmem>>, vector<16x32xf32>
    %cst = arith.constant dense<0.000000e+00> : vector<8x32xf32>
    %4 = tpu.matmul %0, %3, %cst {dimension_numbers = #tpu.dot_dimension_numbers<[1], [0], [0], [1], [0, 0, 1, 1], [], []>} : vector<8x16xf32>, vector<16x32xf32>, vector<8x32xf32> -> vector<8x32xf32>
    %c0_4 = arith.constant 0 : index
    %c0_5 = arith.constant 0 : index
    %5 = vector.load %arg4[%c0_4, %c0_5] : memref<4x32xf32, #tpu.memory_space<vmem>>, vector<1x32xf32>
    %c1_6 = arith.constant 1 : index
    %c0_7 = arith.constant 0 : index
    %6 = vector.load %arg4[%c1_6, %c0_7] : memref<4x32xf32, #tpu.memory_space<vmem>>, vector<1x32xf32>
    %cst_8 = arith.constant dense<0.000000e+00> : vector<32xf32>
    %7 = vector.multi_reduction <add>, %4, %cst_8 [0] : vector<8x32xf32> to vector<32xf32>
    %8 = vector.shape_cast %7 : vector<32xf32> to vector<1x32xf32>
    %9 = arith.mulf %4, %4 : vector<8x32xf32>
    %cst_9 = arith.constant dense<0.000000e+00> : vector<32xf32>
    %10 = vector.multi_reduction <add>, %9, %cst_9 [0] : vector<8x32xf32> to vector<32xf32>
    %11 = vector.shape_cast %10 : vector<32xf32> to vector<1x32xf32>
    %cst_10 = arith.constant 1.250000e-01 : f32
    %12 = vector.broadcast %cst_10 : f32 to vector<1x32xf32>
    %13 = arith.mulf %8, %12 : vector<1x32xf32>
    %cst_11 = arith.constant 1.250000e-01 : f32
    %14 = vector.broadcast %cst_11 : f32 to vector<1x32xf32>
    %15 = arith.mulf %11, %14 : vector<1x32xf32>
    %16 = arith.mulf %13, %13 : vector<1x32xf32>
    %17 = arith.subf %15, %16 : vector<1x32xf32>
    %cst_12 = arith.constant 9.99999974E-6 : f32
    %18 = vector.broadcast %cst_12 : f32 to vector<1x32xf32>
    %19 = arith.addf %17, %18 : vector<1x32xf32>
    %20 = math.rsqrt %19 : vector<1x32xf32>
    %21 = arith.mulf %5, %20 : vector<1x32xf32>
    %22 = arith.mulf %13, %21 : vector<1x32xf32>
    %23 = arith.subf %6, %22 : vector<1x32xf32>
    %24 = vector.broadcast %21 : vector<1x32xf32> to vector<8x32xf32>
    %25 = arith.mulf %4, %24 : vector<8x32xf32>
    %26 = vector.broadcast %23 : vector<1x32xf32> to vector<8x32xf32>
    %27 = arith.addf %25, %26 : vector<8x32xf32>
    %cst_13 = arith.constant 0.000000e+00 : f32
    %28 = vector.broadcast %cst_13 : f32 to vector<8x32xf32>
    %29 = arith.cmpf ogt, %27, %28 : vector<8x32xf32>
    %30 = vector.broadcast %1 : f32 to vector<8x32xf32>
    %31 = arith.mulf %30, %27 : vector<8x32xf32>
    %32 = arith.select %29, %27, %31 : vector<8x32xi1>, vector<8x32xf32>
    %c0_14 = arith.constant 0 : index
    %c0_15 = arith.constant 0 : index
    %33 = vector.load %arg2[%c0_14, %c0_15] : memref<32x32xf32, #tpu.memory_space<vmem>>, vector<32x32xf32>
    %cst_16 = arith.constant dense<0.000000e+00> : vector<8x32xf32>
    %34 = tpu.matmul %32, %33, %cst_16 {dimension_numbers = #tpu.dot_dimension_numbers<[1], [0], [0], [1], [0, 0, 1, 1], [], []>} : vector<8x32xf32>, vector<32x32xf32>, vector<8x32xf32> -> vector<8x32xf32>
    %c2 = arith.constant 2 : index
    %c0_17 = arith.constant 0 : index
    %35 = vector.load %arg4[%c2, %c0_17] : memref<4x32xf32, #tpu.memory_space<vmem>>, vector<1x32xf32>
    %c3 = arith.constant 3 : index
    %c0_18 = arith.constant 0 : index
    %36 = vector.load %arg4[%c3, %c0_18] : memref<4x32xf32, #tpu.memory_space<vmem>>, vector<1x32xf32>
    %cst_19 = arith.constant dense<0.000000e+00> : vector<32xf32>
    %37 = vector.multi_reduction <add>, %34, %cst_19 [0] : vector<8x32xf32> to vector<32xf32>
    %38 = vector.shape_cast %37 : vector<32xf32> to vector<1x32xf32>
    %39 = arith.mulf %34, %34 : vector<8x32xf32>
    %cst_20 = arith.constant dense<0.000000e+00> : vector<32xf32>
    %40 = vector.multi_reduction <add>, %39, %cst_20 [0] : vector<8x32xf32> to vector<32xf32>
    %41 = vector.shape_cast %40 : vector<32xf32> to vector<1x32xf32>
    %cst_21 = arith.constant 1.250000e-01 : f32
    %42 = vector.broadcast %cst_21 : f32 to vector<1x32xf32>
    %43 = arith.mulf %38, %42 : vector<1x32xf32>
    %cst_22 = arith.constant 1.250000e-01 : f32
    %44 = vector.broadcast %cst_22 : f32 to vector<1x32xf32>
    %45 = arith.mulf %41, %44 : vector<1x32xf32>
    %46 = arith.mulf %43, %43 : vector<1x32xf32>
    %47 = arith.subf %45, %46 : vector<1x32xf32>
    %cst_23 = arith.constant 9.99999974E-6 : f32
    %48 = vector.broadcast %cst_23 : f32 to vector<1x32xf32>
    %49 = arith.addf %47, %48 : vector<1x32xf32>
    %50 = math.rsqrt %49 : vector<1x32xf32>
    %51 = arith.mulf %35, %50 : vector<1x32xf32>
    %52 = arith.mulf %43, %51 : vector<1x32xf32>
    %53 = arith.subf %36, %52 : vector<1x32xf32>
    %54 = vector.broadcast %51 : vector<1x32xf32> to vector<8x32xf32>
    %55 = arith.mulf %34, %54 : vector<8x32xf32>
    %56 = vector.broadcast %53 : vector<1x32xf32> to vector<8x32xf32>
    %57 = arith.addf %55, %56 : vector<8x32xf32>
    %cst_24 = arith.constant 0.000000e+00 : f32
    %58 = vector.broadcast %cst_24 : f32 to vector<8x32xf32>
    %59 = arith.cmpf ogt, %57, %58 : vector<8x32xf32>
    %60 = vector.broadcast %2 : f32 to vector<8x32xf32>
    %61 = arith.mulf %60, %57 : vector<8x32xf32>
    %62 = arith.select %59, %57, %61 : vector<8x32xi1>, vector<8x32xf32>
    %c0_25 = arith.constant 0 : index
    %c0_26 = arith.constant 0 : index
    %63 = vector.load %arg3[%c0_25, %c0_26] : memref<32x4xf32, #tpu.memory_space<vmem>>, vector<32x4xf32>
    %cst_27 = arith.constant dense<0.000000e+00> : vector<8x4xf32>
    %64 = tpu.matmul %62, %63, %cst_27 {dimension_numbers = #tpu.dot_dimension_numbers<[1], [0], [0], [1], [0, 0, 1, 1], [], []>} : vector<8x32xf32>, vector<32x4xf32>, vector<8x4xf32> -> vector<8x4xf32>
    %c0_28 = arith.constant 0 : index
    %c0_29 = arith.constant 0 : index
    %65 = vector.load %arg5[%c0_28, %c0_29] : memref<1x4xf32, #tpu.memory_space<vmem>>, vector<1x4xf32>
    %66 = vector.broadcast %65 : vector<1x4xf32> to vector<8x4xf32>
    %67 = arith.addf %64, %66 : vector<8x4xf32>
    %c0_30 = arith.constant 0 : index
    %c0_31 = arith.constant 0 : index
    %68 = vector.load %arg7[%c0_30, %c0_31] : memref<8x4xf32, #tpu.memory_space<vmem>>, vector<8x4xf32>
    tpu.vector_store %arg7[%c0_30, %c0_31], %67 {strides = array<i32>} : memref<8x4xf32, #tpu.memory_space<vmem>>, vector<8x4xf32>,
    return
  }
}

</mosaic_0001>

<llo_original>
// kernel: dqn_forward.1
$region0: #{dqn_forward.1}
  #allocation0 [shape = 'u32[]', space=smem, size = 0x4, offset = 0x4, fixed_abs, tag = 'smem constant byte address 0x4 - core index']
  #allocation1 [shape = 'u32[72,128]{1,0:T(1,128)}', space=vmem, size = 0x9000, scoped, tag = 'internal scratch']
  %s0 = inlined_call_operand.vmem [shape: f32[8,16], index: 0, kind: input, shape index: {}]
  %s1 = inlined_call_operand.hbm [shape: f32[16,32], index: 1, kind: input, shape index: {}]
  %s2 = inlined_call_operand.vmem [shape: f32[32,32], index: 2, kind: input, shape index: {}]
  %s3 = inlined_call_operand.vmem [shape: f32[32,4], index: 3, kind: input, shape index: {}]
  %s4 = inlined_call_operand.vmem [shape: f32[4,32], index: 4, kind: input, shape index: {}]
  %s5 = inlined_call_operand.vmem [shape: f32[1,4], index: 5, kind: input, shape index: {}]
  %s6 = inlined_call_operand.vmem [shape: f32[2], index: 6, kind: input, shape index: {}]
  %s7 = inlined_call_operand.vmem [shape: f32[8,4], index: 7, kind: output, shape index: {}]
  %s8 = sld [smem:[#allocation0]]
  $region46: #{dqn_forward.1} parent=0
    _
  %s10 = ssub.s32 1, %s8
  %s11 = scalar_select 0, %s10, %s8
  $region1: #{dqn_forward.1} parent=0
    #allocation2 [shape = 'u8[8192]{0}', space=vmem, size = 0x2000, scoped, tag = 'input window, operand 1, single buffered']
    #allocation3 [shape = 's32[1]{0}', space=sflag, size = 0x4, scoped, tag = 'scoped memory for dqn_forward.1']
    #allocation4 [shape = 's32[1]{0}', space=sflag, size = 0x4, scoped, tag = 'scoped memory for dqn_forward.1']
    #allocation5 [shape = 'u8[512]{0}', space=smem, size = 0x200, scoped, tag = 'input window, operand 6, single buffered']
    %12 = vsyncpa [#allocation3], 0
    %13 = vsyncpa [#allocation4], 0
    // Predicated region
    $region2: #{dqn_forward.1} parent=1 // pred_check
      _
    $region3: #{dqn_forward.1} parent=1 // pred_check_branch
      %15 = sbr.rel (0) target = $region5
    $region4: #{dqn_forward.1} parent=1 // pred_region
      _
    $region5: #{dqn_forward.1} parent=1 // pred_fallthru
      _
    // Predicated region
    $region6: #{dqn_forward.1} parent=1 // pred_check
      _
    $region7: #{dqn_forward.1} parent=1 // pred_check_branch
      %17 = sbr.rel (0) target = $region9
    $region8: #{dqn_forward.1} parent=1 // pred_region
      %19 = vsyncadd [#allocation3], 0
      %s20 = sshll.u32 %s1, 4
      %s21 = int_to_ptr.hbm [resolvable:$true] %s20
      %s22 = sshll.u32 [#allocation2], 4
      %s23 = int_to_ptr.vmem [resolvable:$true] %s22
      %28 = dma.hbm_to_vmem [thread:$0]  %s21, 256, %s23, [#allocation3], 128, 128, 8
    $region9: #{dqn_forward.1} parent=1 // pred_fallthru
      _
    // Predicated region
    $region10: #{dqn_forward.1} parent=1 // pred_check
      _
    $region11: #{dqn_forward.1} parent=1 // pred_check_branch
      %30 = sbr.rel (0) target = $region13
    $region12: #{dqn_forward.1} parent=1 // pred_region
      _
    $region13: #{dqn_forward.1} parent=1 // pred_fallthru
      _
    // Predicated region
    $region14: #{dqn_forward.1} parent=1 // pred_check
      _
    $region15: #{dqn_forward.1} parent=1 // pred_check_branch
      %32 = sbr.rel (0) target = $region17
    $region16: #{dqn_forward.1} parent=1 // pred_region
      _
    $region17: #{dqn_forward.1} parent=1 // pred_fallthru
      _
    // Predicated region
    $region18: #{dqn_forward.1} parent=1 // pred_check
      _
    $region19: #{dqn_forward.1} parent=1 // pred_check_branch
      %34 = sbr.rel (0) target = $region21
    $region20: #{dqn_forward.1} parent=1 // pred_region
      _
    $region21: #{dqn_forward.1} parent=1 // pred_fallthru
      _
    // Predicated region
    $region22: #{dqn_forward.1} parent=1 // pred_check
      _
    $region23: #{dqn_forward.1} parent=1 // pred_check_branch
      %36 = sbr.rel (0) target = $region25
    $region24: #{dqn_forward.1} parent=1 // pred_region
      _
    $region25: #{dqn_forward.1} parent=1 // pred_fallthru
      _
    // Predicated region
    $region26: #{dqn_forward.1} parent=1 // pred_check
      _
    $region27: #{dqn_forward.1} parent=1 // pred_check_branch
      %38 = sbr.rel (0) target = $region29
    $region28: #{dqn_forward.1} parent=1 // pred_region
      %40 = vsyncadd [#allocation4], 0
      %s42 = sshll.u32 %s6, 4
      %s43 = int_to_ptr.vmem [resolvable:$true] %s42
      %45 = dma.vmem_to_smem %s43, 16, [#allocation5], [#allocation4]
    $region29: #{dqn_forward.1} parent=1 // pred_fallthru
      _
    // Predicated region
    $region30: #{dqn_forward.1} parent=1 // pred_check
      _
    $region31: #{dqn_forward.1} parent=1 // pred_check_branch
      %47 = sbr.rel (0) target = $region33
    $region32: #{dqn_forward.1} parent=1 // pred_region
      %49 = dma.done [#allocation3], 256
    $region33: #{dqn_forward.1} parent=1 // pred_fallthru
      _
    // Predicated region
    $region34: #{dqn_forward.1} parent=1 // pred_check
      _
    $region35: #{dqn_forward.1} parent=1 // pred_check_branch
      %51 = sbr.rel (0) target = $region37
    $region36: #{dqn_forward.1} parent=1 // pred_region
      %53 = dma.done [#allocation4], 16
    $region37: #{dqn_forward.1} parent=1 // pred_fallthru
      _
    %54 = sfence
    %v55 = vld [vmem:[%s0] sm:$0xff]
    %s56 = sld [smem:[#allocation5]]
    %s57 = sld [smem:[#allocation5 + $0x1]]
    %v58 = vld [vmem:[#allocation2] sm:$0xff]
    %v59 = vld [vmem:[#allocation2 + $0x8] sm:$0xff]
    %vm60 = vcmask 130048
    %v62 = vsel %vm60, %v55, 0
    %64 = vmatpush.msra.mxu0 0.0
    %65 = vmatpush.msra.mxu0 0.0
    %66 = vmatpush.msra.mxu0 0.0
    %67 = vmatpush.msra.mxu0 0.0
    %68 = vmatpush.msra.mxu0 0.0
    %69 = vmatpush.msra.mxu0 0.0
    %70 = vmatpush.msra.mxu0 0.0
    %71 = vmatpush.msra.mxu0 0.0
    %72 = vmatpush.msra.mxu0 0.0
    %73 = vmatpush.msra.mxu0 0.0
    %74 = vmatpush.msra.mxu0 0.0
    %75 = vmatpush.msra.mxu0 0.0
    %76 = vmatpush.msra.mxu0 0.0
    %77 = vmatpush.msra.mxu0 0.0
    %78 = vmatpush.msra.mxu0 %v59
    %79 = vmatpush.msra.mxu0 %v58
    %80 = vmatmul.f32.gmra.mxu0 %v62
    %v81 = vpop.f32.mrf.mxu0
    %v82 = vadd.f32 0.0, %v81
    %83 = vdwg.mxu0
    %v84 = vld [vmem:[%s4] sm:$0x1]
    %v85 = vld [vmem:[%s4 + $0x1] sm:$0x1]
    %vm86 = vcmask 261120
    %v87 = vsel %vm86, %v82, 0.0
    %v88 = vrot.slane %v87, 4
    %v89 = vadd.f32 %v87, %v88
    %v90 = vrot.slane %v89, 2
    %v91 = vadd.f32 %v89, %v90
    %v92 = vrot.slane %v91, 1
    %v93 = vadd.f32 %v91, %v92
    %v94 = vmul.f32 %v82, %v82
    %v95 = vsel %vm86, %v94, 0.0
    %v96 = vrot.slane %v95, 4
    %v97 = vadd.f32 %v95, %v96
    %v98 = vrot.slane %v97, 2
    %v99 = vadd.f32 %v97, %v98
    %v100 = vrot.slane %v99, 1
    %v101 = vadd.f32 %v99, %v100
    %v102 = vmul.f32 %v93, 0.125
    %v103 = vmul.f32 %v101, 0.125
    %v104 = vmul.f32 %v102, %v102
    %v105 = vsub.f32 %v103, %v104
    %v106 = vadd.f32 %v105, 1e-05
    %v107 = vrsqrt.pop %v106
    %v108 = vmul.f32 %v107, %v106
    %v109 = vmul.f32 %v108, %v107
    %v110 = vmul.f32 0.5, %v109
    %v111 = vsub.f32 1.5, %v110
    %v112 = vmul.f32 %v107, %v111
    %vm113 = vweird.f32 %v106
    %vm114 = vweird.f32 %v107
    %vm115 = vmor %vm113, %vm114
    %v116 = vsel %vm115, %v107, %v112
    %v117 = vmul.f32 %v84, %v116
    %v118 = vmul.f32 %v102, %v117
    %v119 = vsub.f32 %v85, %v118
    %v120 = vperm.slane %v117, 0
    %v121 = vmul.f32 %v82, %v120
    %v122 = vperm.slane %v119, 0
    %v123 = vadd.f32 %v121, %v122
    %vm124 = vcmp.gt.f32.partialorder %v123, 0.0
    %v125 = vstv %s56
    %v126 = vmul.f32 %v125, %v123
    %v127 = vsel %vm124, %v123, %v126
    %v128 = vld [vmem:[%s2] sm:$0xff]
    %v129 = vld [vmem:[%s2 + $0x8] sm:$0xff]
    %v130 = vld [vmem:[%s2 + $0x10] sm:$0xff]
    %v131 = vld [vmem:[%s2 + $0x18] sm:$0xff]
    %v133 = vsel %vm86, %v127, 0
    %135 = vmatpush.msra.mxu0 0.0
    %136 = vmatpush.msra.mxu0 0.0
    %137 = vmatpush.msra.mxu0 0.0
    %138 = vmatpush.msra.mxu0 0.0
    %139 = vmatpush.msra.mxu0 0.0
    %140 = vmatpush.msra.mxu0 0.0
    %141 = vmatpush.msra.mxu0 0.0
    %142 = vmatpush.msra.mxu0 0.0
    %143 = vmatpush.msra.mxu0 0.0
    %144 = vmatpush.msra.mxu0 0.0
    %145 = vmatpush.msra.mxu0 0.0
    %146 = vmatpush.msra.mxu0 0.0
    %147 = vmatpush.msra.mxu0 %v131
    %148 = vmatpush.msra.mxu0 %v130
    %149 = vmatpush.msra.mxu0 %v129
    %150 = vmatpush.msra.mxu0 %v128
    %151 = vmatmul.f32.gmra.mxu0 %v133
    %v152 = vpop.f32.mrf.mxu0
    %v153 = vadd.f32 0.0, %v152
    %154 = vdwg.mxu0
    %v155 = vld [vmem:[%s4 + $0x2] sm:$0x1]
    %v156 = vld [vmem:[%s4 + $0x3] sm:$0x1]
    %v157 = vsel %vm86, %v153, 0.0
    %v158 = vrot.slane %v157, 4
    %v159 = vadd.f32 %v157, %v158
    %v160 = vrot.slane %v159, 2
    %v161 = vadd.f32 %v159, %v160
    %v162 = vrot.slane %v161, 1
    %v163 = vadd.f32 %v161, %v162
    %v164 = vmul.f32 %v153, %v153
    %v165 = vsel %vm86, %v164, 0.0
    %v166 = vrot.slane %v165, 4
    %v167 = vadd.f32 %v165, %v166
    %v168 = vrot.slane %v167, 2
    %v169 = vadd.f32 %v167, %v168
    %v170 = vrot.slane %v169, 1
    %v171 = vadd.f32 %v169, %v170
    %v172 = vmul.f32 %v163, 0.125
    %v173 = vmul.f32 %v171, 0.125
    %v174 = vmul.f32 %v172, %v172
    %v175 = vsub.f32 %v173, %v174
    %v176 = vadd.f32 %v175, 1e-05
    %v177 = vrsqrt.pop %v176
    %v178 = vmul.f32 %v177, %v176
    %v179 = vmul.f32 %v178, %v177
    %v180 = vmul.f32 0.5, %v179
    %v181 = vsub.f32 1.5, %v180
    %v182 = vmul.f32 %v177, %v181
    %vm183 = vweird.f32 %v176
    %vm184 = vweird.f32 %v177
    %vm185 = vmor %vm183, %vm184
    %v186 = vsel %vm185, %v177, %v182
    %v187 = vmul.f32 %v155, %v186
    %v188 = vmul.f32 %v172, %v187
    %v189 = vsub.f32 %v156, %v188
    %v190 = vperm.slane %v187, 0
    %v191 = vmul.f32 %v153, %v190
    %v192 = vperm.slane %v189, 0
    %v193 = vadd.f32 %v191, %v192
    %vm194 = vcmp.gt.f32.partialorder %v193, 0.0
    %v195 = vstv %s57
    %v196 = vmul.f32 %v195, %v193
    %v197 = vsel %vm194, %v193, %v196
    %v198 = vld [vmem:[%s3] sm:$0xff]
    %v199 = vld [vmem:[%s3 + $0x8] sm:$0xff]
    %v200 = vld [vmem:[%s3 + $0x10] sm:$0xff]
    %v201 = vld [vmem:[%s3 + $0x18] sm:$0xff]
    %v202 = vld [vmem:[%s5] sm:$0x1]
    %v204 = vperm.slane %v202, 0
    %v207 = vsel %vm86, %v197, 0
    %209 = vmatpush.msra.mxu0 0.0
    %210 = vmatpush.msra.mxu0 0.0
    %211 = vmatpush.msra.mxu0 0.0
    %212 = vmatpush.msra.mxu0 0.0
    %213 = vmatpush.msra.mxu0 0.0
    %214 = vmatpush.msra.mxu0 0.0
    %215 = vmatpush.msra.mxu0 0.0
    %216 = vmatpush.msra.mxu0 0.0
    %217 = vmatpush.msra.mxu0 0.0
    %218 = vmatpush.msra.mxu0 0.0
    %219 = vmatpush.msra.mxu0 0.0
    %220 = vmatpush.msra.mxu0 0.0
    %221 = vmatpush.msra.mxu0 %v201
    %222 = vmatpush.msra.mxu0 %v200
    %223 = vmatpush.msra.mxu0 %v199
    %224 = vmatpush.msra.mxu0 %v198
    %225 = vmatmul.f32.gmra.mxu0 %v207
    %v226 = vpop.f32.mrf.mxu0
    %v227 = vadd.f32 %v204, %v226
    %228 = vdwg.mxu0
    %vm229 = vcmask 31744
    %230 = vst.msk [vmem:[%s7] sm:$0xff] %vm229, %v227
    // Predicated region
    $region38: #{dqn_forward.1} parent=1 // pred_check
      _
    $region39: #{dqn_forward.1} parent=1 // pred_check_branch
      %232 = sbr.rel (0) target = $region41
    $region40: #{dqn_forward.1} parent=1 // pred_region
      _
    $region41: #{dqn_forward.1} parent=1 // pred_fallthru
      _
    // Predicated region
    $region42: #{dqn_forward.1} parent=1 // pred_check
      _
    $region43: #{dqn_forward.1} parent=1 // pred_check_branch
      %234 = sbr.rel (0) target = $region45
    $region44: #{dqn_forward.1} parent=1 // pred_region
      _
    $region45: #{dqn_forward.1} parent=1 // pred_fallthru
      _
    %235 = vsyncpa [#allocation3], 1
    %236 = vsyncpa [#allocation4], 1

</llo_original>
